<compile_context>
chip_gen: v7x
topology: tpu7x:2x2x1
jax: 0.10.0
libtpu: 0.0.40
codegen_flags: <defaults>
</compile_context>

<pallas_src>
import jax
import jax.numpy as jnp
import numpy as np
from jax.experimental import pallas as pl
from jax.experimental.pallas import tpu as pltpu


# ----------------------------------------------------------------------------
# Pallas kernel: fused 3x (matmul + bias) with tanh between layers.
# ----------------------------------------------------------------------------
def _actor_head_kernel(x_ref, w1_ref, b1_ref, w2_ref, b2_ref, w3_ref, b3_ref,
                       o_ref):
    x = x_ref[...].astype(jnp.float32)

    h1 = jnp.tanh(
        jnp.dot(x, w1_ref[...], preferred_element_type=jnp.float32)
        + b1_ref[...])
    h2 = jnp.tanh(
        jnp.dot(h1, w2_ref[...], preferred_element_type=jnp.float32)
        + b2_ref[...])
    logits = (
        jnp.dot(h2, w3_ref[...], preferred_element_type=jnp.float32)
        + b3_ref[...])

    o_ref[...] = logits.astype(o_ref.dtype)


def actor_head_forward(features, params, *, max_batch_tile=512):
    """features: (B, feature_dim) -> logits (B, act_dim)."""
    w1, b1, w2, b2, w3, b3 = params
    B, F = features.shape
    H = w1.shape[1]
    A = w3.shape[1]

    # --- lane-dense output: pad act_dim to a multiple of 128 lanes ---------
    A_pad = max(128, ((A + 127) // 128) * 128)
    if A_pad != A:
        w3p = jnp.zeros((H, A_pad), w3.dtype).at[:, :A].set(w3)
        b3p = jnp.zeros((1, A_pad), b3.dtype).at[:, :A].set(b3)
    else:
        w3p, b3p = w3, b3

    # --- batch tiling: biggest sublane-aligned tile up to max_batch_tile ---
    # For small B this collapses to a single grid step with the whole batch.
    B_align = ((B + 7) // 8) * 8                      # sublane (8) alignment
    batch_tile = min(max_batch_tile, B_align)
    B_pad = pl.cdiv(B, batch_tile) * batch_tile
    x = features
    if B_pad != B:
        x = jnp.pad(features, ((0, B_pad - B), (0, 0)))

    grid = (B_pad // batch_tile,)

    # Constant block index (0, 0) => weights/biases stay resident in VMEM
    # across grid steps (no re-DMA per step).
    full = lambda shape: pl.BlockSpec(shape, lambda i: (0, 0))

    out = pl.pallas_call(
        _actor_head_kernel,
        out_shape=jax.ShapeDtypeStruct((B_pad, A_pad), features.dtype),
        grid_spec=pl.GridSpec(
            grid=grid,
            in_specs=[
                pl.BlockSpec((batch_tile, F), lambda i: (i, 0)),  # x tile
                full((F, H)), full((1, H)),                       # layer 1
                full((H, H)), full((1, H)),                       # layer 2
                full((H, A_pad)), full((1, A_pad)),               # layer 3
            ],
            out_specs=pl.BlockSpec((batch_tile, A_pad), lambda i: (i, 0)),
        ),
        compiler_params=pltpu.CompilerParams(
            dimension_semantics=("parallel",)),
        # VMEM footprint here is tiny (a few hundred KB); default scoped VMEM
        # limit is plenty on v5e/v6e/v7x, so no explicit vmem_limit_bytes.
    )(x, w1, b1, w2, b2, w3p, b3p)

    # Strip batch padding and the lane padding of the logits.
    return out[:B, :A]


# ----------------------------------------------------------------------------
# Deterministic parameter init (mirrors layer_init: orthogonal weight w/ gain,
# zero bias). PyTorch inits (out, in) orthogonally; we init (in, out) — still
# a (semi-)orthogonal matrix, just our chosen layout (square layers here).
# ----------------------------------------------------------------------------
def init_actor_head_params(key, feature_dim, hidden, act_dim, dtype=jnp.float32):
    k1, k2, k3 = jax.random.split(key, 3)
    ortho = lambda std: jax.nn.initializers.orthogonal(scale=std)
    w1 = ortho(np.sqrt(2))(k1, (feature_dim, hidden), dtype)
    b1 = jnp.zeros((1, hidden), dtype)
    w2 = ortho(np.sqrt(2))(k2, (hidden, hidden), dtype)
    b2 = jnp.zeros((1, hidden), dtype)
    w3 = ortho(0.01)(k3, (hidden, act_dim), dtype)
    b3 = jnp.zeros((1, act_dim), dtype)
    return (w1, b1, w2, b2, w3, b3)


# Pure-JAX reference for a sanity check.
def _reference_forward(features, params):
    w1, b1, w2, b2, w3, b3 = params
    h1 = jnp.tanh(features @ w1 + b1)
    h2 = jnp.tanh(h1 @ w2 + b2)
    return h2 @ w3 + b3


if __name__ == "__main__":
    # Small shapes implied by the module: MLP head over hidden features,
    # batch = 16 (could be a flattened batch*seq).
    BATCH, FEATURE_DIM, HIDDEN, ACT_DIM = 16, 32, 32, 6

    key = jax.random.PRNGKey(0)
    k_feat, k_params = jax.random.split(key)

    features = jax.random.normal(k_feat, (BATCH, FEATURE_DIM), jnp.float32)
    params = init_actor_head_params(k_params, FEATURE_DIM, HIDDEN, ACT_DIM)

    logits = actor_head_forward(features, params)
    logits = jax.block_until_ready(logits)

    ref = _reference_forward(features, params)
    np.testing.assert_allclose(np.asarray(logits), np.asarray(ref),
                               rtol=1e-5, atol=1e-5)

    # TODO(synk): get_action / Categorical sampling (torch.distributions) is
    # host-side glue, not part of the forward hot path — not kernelized.
    print("KERNEL_OK")
</pallas_src>

<mosaic_0001>
module attributes {stable_mosaic.version = 11 : i64} {
  func.func @_actor_head_kernel(%arg0: i32, %arg1: memref<16x32xf32, #tpu.memory_space<vmem>>, %arg2: memref<32x32xf32, #tpu.memory_space<vmem>>, %arg3: memref<1x32xf32, #tpu.memory_space<vmem>>, %arg4: memref<32x32xf32, #tpu.memory_space<vmem>>, %arg5: memref<1x32xf32, #tpu.memory_space<vmem>>, %arg6: memref<32x128xf32, #tpu.memory_space<vmem>>, %arg7: memref<1x128xf32, #tpu.memory_space<vmem>>, %arg8: memref<16x128xf32, #tpu.memory_space<vmem>>) attributes {dimension_semantics = [#tpu.dimension_semantics<parallel>], iteration_bounds = array<i64: 1>, scalar_prefetch = 0 : i64, scratch_operands = 0 : i64, tpu.core_type = #tpu.core_type<tc>, window_params = [{transform_indices = @transform_0, window_bounds = array<i64: 16, 32>}, {pipeline_mode = #tpu.pipeline_mode<synchronous>, transform_indices = @transform_1, window_bounds = array<i64: 32, 32>}, {pipeline_mode = #tpu.pipeline_mode<synchronous>, transform_indices = @transform_2, window_bounds = array<i64: 1, 32>}, {pipeline_mode = #tpu.pipeline_mode<synchronous>, transform_indices = @transform_3, window_bounds = array<i64: 32, 32>}, {pipeline_mode = #tpu.pipeline_mode<synchronous>, transform_indices = @transform_4, window_bounds = array<i64: 1, 32>}, {pipeline_mode = #tpu.pipeline_mode<synchronous>, transform_indices = @transform_5, window_bounds = array<i64: 32, 128>}, {pipeline_mode = #tpu.pipeline_mode<synchronous>, transform_indices = @transform_6, window_bounds = array<i64: 1, 128>}, {transform_indices = @transform_7, window_bounds = array<i64: 16, 128>}]} {
    %c0 = arith.constant 0 : index
    %c0_0 = arith.constant 0 : index
    %0 = vector.load %arg1[%c0, %c0_0] : memref<16x32xf32, #tpu.memory_space<vmem>>, vector<16x32xf32>
    %c0_1 = arith.constant 0 : index
    %c0_2 = arith.constant 0 : index
    %1 = vector.load %arg2[%c0_1, %c0_2] : memref<32x32xf32, #tpu.memory_space<vmem>>, vector<32x32xf32>
    %cst = arith.constant dense<0.000000e+00> : vector<16x32xf32>
    %2 = tpu.matmul %0, %1, %cst {dimension_numbers = #tpu.dot_dimension_numbers<[1], [0], [0], [1], [0, 0, 1, 1], [], []>} : vector<16x32xf32>, vector<32x32xf32>, vector<16x32xf32> -> vector<16x32xf32>
    %c0_3 = arith.constant 0 : index
    %c0_4 = arith.constant 0 : index
    %3 = vector.load %arg3[%c0_3, %c0_4] : memref<1x32xf32, #tpu.memory_space<vmem>>, vector<1x32xf32>
    %4 = vector.broadcast %3 : vector<1x32xf32> to vector<16x32xf32>
    %5 = arith.addf %2, %4 : vector<16x32xf32>
    %6 = math.tanh %5 : vector<16x32xf32>
    %c0_5 = arith.constant 0 : index
    %c0_6 = arith.constant 0 : index
    %7 = vector.load %arg4[%c0_5, %c0_6] : memref<32x32xf32, #tpu.memory_space<vmem>>, vector<32x32xf32>
    %cst_7 = arith.constant dense<0.000000e+00> : vector<16x32xf32>
    %8 = tpu.matmul %6, %7, %cst_7 {dimension_numbers = #tpu.dot_dimension_numbers<[1], [0], [0], [1], [0, 0, 1, 1], [], []>} : vector<16x32xf32>, vector<32x32xf32>, vector<16x32xf32> -> vector<16x32xf32>
    %c0_8 = arith.constant 0 : index
    %c0_9 = arith.constant 0 : index
    %9 = vector.load %arg5[%c0_8, %c0_9] : memref<1x32xf32, #tpu.memory_space<vmem>>, vector<1x32xf32>
    %10 = vector.broadcast %9 : vector<1x32xf32> to vector<16x32xf32>
    %11 = arith.addf %8, %10 : vector<16x32xf32>
    %12 = math.tanh %11 : vector<16x32xf32>
    %c0_10 = arith.constant 0 : index
    %c0_11 = arith.constant 0 : index
    %13 = vector.load %arg6[%c0_10, %c0_11] : memref<32x128xf32, #tpu.memory_space<vmem>>, vector<32x128xf32>
    %cst_12 = arith.constant dense<0.000000e+00> : vector<16x128xf32>
    %14 = tpu.matmul %12, %13, %cst_12 {dimension_numbers = #tpu.dot_dimension_numbers<[1], [0], [0], [1], [0, 0, 1, 1], [], []>} : vector<16x32xf32>, vector<32x128xf32>, vector<16x128xf32> -> vector<16x128xf32>
    %c0_13 = arith.constant 0 : index
    %c0_14 = arith.constant 0 : index
    %15 = vector.load %arg7[%c0_13, %c0_14] : memref<1x128xf32, #tpu.memory_space<vmem>>, vector<1x128xf32>
    %16 = vector.broadcast %15 : vector<1x128xf32> to vector<16x128xf32>
    %17 = arith.addf %14, %16 : vector<16x128xf32>
    %c0_15 = arith.constant 0 : index
    %c0_16 = arith.constant 0 : index
    %18 = vector.load %arg8[%c0_15, %c0_16] : memref<16x128xf32, #tpu.memory_space<vmem>>, vector<16x128xf32>
    tpu.vector_store %arg8[%c0_15, %c0_16], %17 {strides = array<i32>} : memref<16x128xf32, #tpu.memory_space<vmem>>, vector<16x128xf32>,
    return
  }
  func.func @transform_0(%arg0: i32) -> (i32, i32) {
    %c0_i32 = arith.constant 0 : i32
    %c0_i32_0 = arith.constant 0 : i32
    return %arg0, %c0_i32 : i32, i32
  }
  func.func @transform_1(%arg0: i32) -> (i32, i32) {
    %c0_i32 = arith.constant 0 : i32
    %c0_i32_0 = arith.constant 0 : i32
    %c0_i32_1 = arith.constant 0 : i32
    return %c0_i32, %c0_i32_0 : i32, i32
  }
  func.func @transform_2(%arg0: i32) -> (i32, i32) {
    %c0_i32 = arith.constant 0 : i32
    %c0_i32_0 = arith.constant 0 : i32
    %c0_i32_1 = arith.constant 0 : i32
    return %c0_i32, %c0_i32_0 : i32, i32
  }
  func.func @transform_3(%arg0: i32) -> (i32, i32) {
    %c0_i32 = arith.constant 0 : i32
    %c0_i32_0 = arith.constant 0 : i32
    %c0_i32_1 = arith.constant 0 : i32
    return %c0_i32, %c0_i32_0 : i32, i32
  }
  func.func @transform_4(%arg0: i32) -> (i32, i32) {
    %c0_i32 = arith.constant 0 : i32
    %c0_i32_0 = arith.constant 0 : i32
    %c0_i32_1 = arith.constant 0 : i32
    return %c0_i32, %c0_i32_0 : i32, i32
  }
  func.func @transform_5(%arg0: i32) -> (i32, i32) {
    %c0_i32 = arith.constant 0 : i32
    %c0_i32_0 = arith.constant 0 : i32
    %c0_i32_1 = arith.constant 0 : i32
    return %c0_i32, %c0_i32_0 : i32, i32
  }
  func.func @transform_6(%arg0: i32) -> (i32, i32) {
    %c0_i32 = arith.constant 0 : i32
    %c0_i32_0 = arith.constant 0 : i32
    %c0_i32_1 = arith.constant 0 : i32
    return %c0_i32, %c0_i32_0 : i32, i32
  }
  func.func @transform_7(%arg0: i32) -> (i32, i32) {
    %c0_i32 = arith.constant 0 : i32
    %c0_i32_0 = arith.constant 0 : i32
    return %arg0, %c0_i32 : i32, i32
  }
}

</mosaic_0001>

<llo_original>
// kernel: tpu_custom_call.1
$region0: #{tpu_custom_call.1}
  #allocation0 [shape = 'u32[]', space=smem, size = 0x4, offset = 0x4, fixed_abs, tag = 'smem constant byte address 0x4 - core index']
  #allocation1 [shape = 'u32[144,128]{1,0:T(1,128)}', space=vmem, size = 0x12000, scoped, tag = 'internal scratch']
  %s0 = inlined_call_operand.hbm [shape: f32[16,32], index: 0, kind: input, shape index: {}]
  %s1 = inlined_call_operand.hbm [shape: f32[32,32], index: 1, kind: input, shape index: {}]
  %s2 = inlined_call_operand.vmem [shape: f32[1,32], index: 2, kind: input, shape index: {}]
  %s3 = inlined_call_operand.hbm [shape: f32[32,32], index: 3, kind: input, shape index: {}]
  %s4 = inlined_call_operand.vmem [shape: f32[1,32], index: 4, kind: input, shape index: {}]
  %s5 = inlined_call_operand.hbm [shape: f32[32,128], index: 5, kind: input, shape index: {}]
  %s6 = inlined_call_operand.vmem [shape: f32[1,128], index: 6, kind: input, shape index: {}]
  %s7 = inlined_call_operand.hbm [shape: f32[16,128], index: 7, kind: output, shape index: {}]
  %s8 = sld [smem:[#allocation0]]
  $region54: #{tpu_custom_call.1} parent=0
    _
  %s10 = ssub.s32 1, %s8
  %s11 = scalar_select 0, %s10, %s8
  $region1: #{tpu_custom_call.1} parent=0
    #allocation2 [shape = 'u8[8192]{0}', space=vmem, size = 0x2000, scoped, tag = 'input window, operand 0, single buffered']
    #allocation3 [shape = 's32[1]{0}', space=sflag, size = 0x4, scoped, tag = 'scoped memory for tpu_custom_call.1']
    #allocation4 [shape = 's32[1]{0}', space=sflag, size = 0x4, scoped, tag = 'scoped memory for tpu_custom_call.1']
    #allocation5 [shape = 'u8[16384]{0}', space=vmem, size = 0x4000, scoped, tag = 'input window, operand 1, single buffered']
    #allocation6 [shape = 's32[1]{0}', space=sflag, size = 0x4, scoped, tag = 'scoped memory for tpu_custom_call.1']
    #allocation7 [shape = 'u8[16384]{0}', space=vmem, size = 0x4000, scoped, tag = 'input window, operand 3, single buffered']
    #allocation8 [shape = 'u8[16384]{0}', space=vmem, size = 0x4000, scoped, tag = 'input window, operand 5, single buffered']
    #allocation9 [shape = 's32[1]{0}', space=sflag, size = 0x4, scoped, tag = 'scoped memory for tpu_custom_call.1']
    #allocation10 [shape = 'u8[8192]{0}', space=vmem, size = 0x2000, scoped, tag = 'output window, operand 0, single buffered']
    %12 = vsyncpa [#allocation3], 0
    %13 = vsyncpa [#allocation6], 0
    %14 = vsyncpa [#allocation9], 0
    %15 = vsyncpa [#allocation4], 0
    // Predicated region
    $region2: #{tpu_custom_call.1} parent=1 // pred_check
      _
    $region3: #{tpu_custom_call.1} parent=1 // pred_check_branch
      %17 = sbr.rel (0) target = $region5
    $region4: #{tpu_custom_call.1} parent=1 // pred_region
      %s19 = ssub.s32 256, 256
      %20 = vsyncadd [#allocation3], %s19
      %s21 = sshll.u32 [#allocation2], 4
      %s22 = int_to_ptr.vmem [resolvable:$true] %s21
      %27 = dma.hbm_to_vmem [thread:$0]  %s0, 256, %s22, [#allocation3], 128, 128, 8
    $region5: #{tpu_custom_call.1} parent=1 // pred_fallthru
      _
    // Predicated region
    $region6: #{tpu_custom_call.1} parent=1 // pred_check
      _
    $region7: #{tpu_custom_call.1} parent=1 // pred_check_branch
      %29 = sbr.rel (0) target = $region9
    $region8: #{tpu_custom_call.1} parent=1 // pred_region
      %s31 = ssub.s32 512, 512
      %32 = vsyncadd [#allocation6], %s31
      %s33 = sshll.u32 [#allocation5], 4
      %s34 = int_to_ptr.vmem [resolvable:$true] %s33
      %39 = dma.hbm_to_vmem [thread:$0]  %s1, 512, %s34, [#allocation6], 128, 128, 8
    $region9: #{tpu_custom_call.1} parent=1 // pred_fallthru
      _
    // Predicated region
    $region10: #{tpu_custom_call.1} parent=1 // pred_check
      _
    $region11: #{tpu_custom_call.1} parent=1 // pred_check_branch
      %41 = sbr.rel (0) target = $region13
    $region12: #{tpu_custom_call.1} parent=1 // pred_region
      _
    $region13: #{tpu_custom_call.1} parent=1 // pred_fallthru
      _
    // Predicated region
    $region14: #{tpu_custom_call.1} parent=1 // pred_check
      _
    $region15: #{tpu_custom_call.1} parent=1 // pred_check_branch
      %43 = sbr.rel (0) target = $region17
    $region16: #{tpu_custom_call.1} parent=1 // pred_region
      %s45 = ssub.s32 512, 512
      %46 = vsyncadd [#allocation6], %s45
      %s47 = sshll.u32 [#allocation7], 4
      %s48 = int_to_ptr.vmem [resolvable:$true] %s47
      %53 = dma.hbm_to_vmem [thread:$0]  %s3, 512, %s48, [#allocation6], 128, 128, 8
    $region17: #{tpu_custom_call.1} parent=1 // pred_fallthru
      _
    // Predicated region
    $region18: #{tpu_custom_call.1} parent=1 // pred_check
      _
    $region19: #{tpu_custom_call.1} parent=1 // pred_check_branch
      %55 = sbr.rel (0) target = $region21
    $region20: #{tpu_custom_call.1} parent=1 // pred_region
      _
    $region21: #{tpu_custom_call.1} parent=1 // pred_fallthru
      _
    // Predicated region
    $region22: #{tpu_custom_call.1} parent=1 // pred_check
      _
    $region23: #{tpu_custom_call.1} parent=1 // pred_check_branch
      %57 = sbr.rel (0) target = $region25
    $region24: #{tpu_custom_call.1} parent=1 // pred_region
      %s59 = ssub.s32 512, 512
      %60 = vsyncadd [#allocation9], %s59
      %s61 = sshll.u32 [#allocation8], 4
      %s62 = int_to_ptr.vmem [resolvable:$true] %s61
      %67 = dma.hbm_to_vmem [thread:$0]  %s5, 512, %s62, [#allocation9], 128, 128, 8
    $region25: #{tpu_custom_call.1} parent=1 // pred_fallthru
      _
    // Predicated region
    $region26: #{tpu_custom_call.1} parent=1 // pred_check
      _
    $region27: #{tpu_custom_call.1} parent=1 // pred_check_branch
      %69 = sbr.rel (0) target = $region29
    $region28: #{tpu_custom_call.1} parent=1 // pred_region
      _
    $region29: #{tpu_custom_call.1} parent=1 // pred_fallthru
      _
    // Predicated region
    $region30: #{tpu_custom_call.1} parent=1 // pred_check
      _
    $region31: #{tpu_custom_call.1} parent=1 // pred_check_branch
      %71 = sbr.rel (0) target = $region33
    $region32: #{tpu_custom_call.1} parent=1 // pred_region
      %72 = dma.done [#allocation3], 256
    $region33: #{tpu_custom_call.1} parent=1 // pred_fallthru
      _
    // Predicated region
    $region34: #{tpu_custom_call.1} parent=1 // pred_check
      _
    $region35: #{tpu_custom_call.1} parent=1 // pred_check_branch
      %74 = sbr.rel (0) target = $region37
    $region36: #{tpu_custom_call.1} parent=1 // pred_region
      %75 = dma.done [#allocation6], 512
    $region37: #{tpu_custom_call.1} parent=1 // pred_fallthru
      _
    // Predicated region
    $region38: #{tpu_custom_call.1} parent=1 // pred_check
      _
    $region39: #{tpu_custom_call.1} parent=1 // pred_check_branch
      %77 = sbr.rel (0) target = $region41
    $region40: #{tpu_custom_call.1} parent=1 // pred_region
      %78 = dma.done [#allocation6], 512
    $region41: #{tpu_custom_call.1} parent=1 // pred_fallthru
      _
    // Predicated region
    $region42: #{tpu_custom_call.1} parent=1 // pred_check
      _
    $region43: #{tpu_custom_call.1} parent=1 // pred_check_branch
      %80 = sbr.rel (0) target = $region45
    $region44: #{tpu_custom_call.1} parent=1 // pred_region
      %81 = dma.done [#allocation9], 512
    $region45: #{tpu_custom_call.1} parent=1 // pred_fallthru
      _
    %v82 = vld [vmem:[#allocation2] sm:$0xff]
    %v83 = vld [vmem:[#allocation2 + $0x8] sm:$0xff]
    %v84 = vld [vmem:[#allocation5] sm:$0xff]
    %v85 = vld [vmem:[#allocation5 + $0x8] sm:$0xff]
    %v86 = vld [vmem:[#allocation5 + $0x10] sm:$0xff]
    %v87 = vld [vmem:[#allocation5 + $0x18] sm:$0xff]
    %v88 = vld [vmem:[%s2] sm:$0x1]
    %v90 = vlaneseq
    %v91 = vshrl.u32 %v90, 7
    %v92 = vsub.s32 0, %v91
    %v93 = vrot.slane %v88, %v92
    %vm95 = vcmask 261120
    %v97 = vsel %vm95, %v82, 0
    %v100 = vsel %vm95, %v83, 0
    %102 = vmatprep.subr.mxu0 0.0
    %103 = vmatpush1.msra.mxu0 %v84
    %104 = vmatprep.subr.mxu0 0.0
    %105 = vmatpush1.msra.mxu0 %v85
    %106 = vmatprep.subr.mxu0 0.0
    %107 = vmatpush1.msra.mxu0 %v86
    %108 = vmatprep.subr.mxu0 0.0
    %109 = vmatpush1.msra.mxu0 %v87
    %110 = vmatprep.subr.mxu0 0.0
    %111 = vmatpush1.msra.mxu0 0.0
    %112 = vmatprep.subr.mxu0 0.0
    %113 = vmatpush1.msra.mxu0 0.0
    %114 = vmatprep.subr.mxu0 0.0
    %115 = vmatpush1.msra.mxu0 0.0
    %116 = vmatprep.subr.mxu0 0.0
    %117 = vmatpush1.msra.mxu0 0.0
    %118 = vmatprep.subr.mxu0 0.0
    %119 = vmatpush1.msra.mxu0 0.0
    %120 = vmatprep.subr.mxu0 0.0
    %121 = vmatpush1.msra.mxu0 0.0
    %122 = vmatprep.subr.mxu0 0.0
    %123 = vmatpush1.msra.mxu0 0.0
    %124 = vmatprep.subr.mxu0 0.0
    %125 = vmatpush1.msra.mxu0 0.0
    %126 = vmatprep.subr.mxu0 0.0
    %127 = vmatpush1.msra.mxu0 0.0
    %128 = vmatprep.subr.mxu0 0.0
    %129 = vmatpush1.msra.mxu0 0.0
    %130 = vmatprep.subr.mxu0 0.0
    %131 = vmatpush1.msra.mxu0 0.0
    %132 = vmatprep.subr.mxu0 0.0
    %133 = vmatpush1.msra.mxu0 0.0
    %134 = vmatprep.subr.mxu0 0.0
    %135 = vmatpush1.msra.mxu0 0.0
    %136 = vmatprep.subr.mxu0 0.0
    %137 = vmatpush1.msra.mxu0 0.0
    %138 = vmatprep.subr.mxu0 0.0
    %139 = vmatpush1.msra.mxu0 0.0
    %140 = vmatprep.subr.mxu0 0.0
    %141 = vmatpush1.msra.mxu0 0.0
    %142 = vmatprep.subr.mxu0 0.0
    %143 = vmatpush1.msra.mxu0 0.0
    %144 = vmatprep.subr.mxu0 0.0
    %145 = vmatpush1.msra.mxu0 0.0
    %146 = vmatprep.subr.mxu0 0.0
    %147 = vmatpush1.msra.mxu0 0.0
    %148 = vmatprep.subr.mxu0 0.0
    %149 = vmatpush1.msra.mxu0 0.0
    %150 = vmatprep.subr.mxu0 0.0
    %151 = vmatpush1.msra.mxu0 0.0
    %152 = vmatprep.subr.mxu0 0.0
    %153 = vmatpush1.msra.mxu0 0.0
    %154 = vmatprep.subr.mxu0 0.0
    %155 = vmatpush1.msra.mxu0 0.0
    %156 = vmatprep.subr.mxu0 0.0
    %157 = vmatpush1.msra.mxu0 0.0
    %158 = vmatprep.subr.mxu0 0.0
    %159 = vmatpush1.msra.mxu0 0.0
    %160 = vmatprep.subr.mxu0 0.0
    %161 = vmatpush1.msra.mxu0 0.0
    %162 = vmatprep.subr.mxu0 0.0
    %163 = vmatpush1.msra.mxu0 0.0
    %164 = vmatprep.subr.mxu0 0.0
    %165 = vmatpush1.msra.mxu0 0.0
    %166 = vmatprep.mubr.f32.mxu0 0.0
    %167 = vmatmul.mubr.f32.gmra.mrb[0].mxu0 %v97
    %v168 = vpop.f32.mrb[0].mxu0
    %v169 = vadd.f32 %v93, %v168
    %v170 = vpop.f32.mrb[0].mxu0
    %171 = vmatprep.mubr.f32.mxu0 0.0
    %172 = vmatmul.mubr.f32.gmra.mrb[0].mxu0 %v100
    %v173 = vpop.f32.mrb[0].mxu0
    %v174 = vadd.f32 %v93, %v173
    %v175 = vpop.f32.mrb[0].mxu0
    %176 = vdwg.mxu0
    %v177 = vtanh.pop %v169
    %v178 = vtanh.pop %v174
    %v179 = vld [vmem:[#allocation7] sm:$0xff]
    %v180 = vld [vmem:[#allocation7 + $0x8] sm:$0xff]
    %v181 = vld [vmem:[#allocation7 + $0x10] sm:$0xff]
    %v182 = vld [vmem:[#allocation7 + $0x18] sm:$0xff]
    %v183 = vld [vmem:[%s4] sm:$0x1]
    %v185 = vlaneseq
    %v186 = vshrl.u32 %v185, 7
    %v187 = vsub.s32 0, %v186
    %v188 = vrot.slane %v183, %v187
    %v191 = vsel %vm95, %v177, 0
    %v194 = vsel %vm95, %v178, 0
    %196 = vmatprep.subr.mxu0 0.0
    %197 = vmatpush1.msra.mxu0 %v179
    %198 = vmatprep.subr.mxu0 0.0
    %199 = vmatpush1.msra.mxu0 %v180
    %200 = vmatprep.subr.mxu0 0.0
    %201 = vmatpush1.msra.mxu0 %v181
    %202 = vmatprep.subr.mxu0 0.0
    %203 = vmatpush1.msra.mxu0 %v182
    %204 = vmatprep.subr.mxu0 0.0
    %205 = vmatpush1.msra.mxu0 0.0
    %206 = vmatprep.subr.mxu0 0.0
    %207 = vmatpush1.msra.mxu0 0.0
    %208 = vmatprep.subr.mxu0 0.0
    %209 = vmatpush1.msra.mxu0 0.0
    %210 = vmatprep.subr.mxu0 0.0
    %211 = vmatpush1.msra.mxu0 0.0
    %212 = vmatprep.subr.mxu0 0.0
    %213 = vmatpush1.msra.mxu0 0.0
    %214 = vmatprep.subr.mxu0 0.0
    %215 = vmatpush1.msra.mxu0 0.0
    %216 = vmatprep.subr.mxu0 0.0
    %217 = vmatpush1.msra.mxu0 0.0
    %218 = vmatprep.subr.mxu0 0.0
    %219 = vmatpush1.msra.mxu0 0.0
    %220 = vmatprep.subr.mxu0 0.0
    %221 = vmatpush1.msra.mxu0 0.0
    %222 = vmatprep.subr.mxu0 0.0
    %223 = vmatpush1.msra.mxu0 0.0
    %224 = vmatprep.subr.mxu0 0.0
    %225 = vmatpush1.msra.mxu0 0.0
    %226 = vmatprep.subr.mxu0 0.0
    %227 = vmatpush1.msra.mxu0 0.0
    %228 = vmatprep.subr.mxu0 0.0
    %229 = vmatpush1.msra.mxu0 0.0
    %230 = vmatprep.subr.mxu0 0.0
    %231 = vmatpush1.msra.mxu0 0.0
    %232 = vmatprep.subr.mxu0 0.0
    %233 = vmatpush1.msra.mxu0 0.0
    %234 = vmatprep.subr.mxu0 0.0
    %235 = vmatpush1.msra.mxu0 0.0
    %236 = vmatprep.subr.mxu0 0.0
    %237 = vmatpush1.msra.mxu0 0.0
    %238 = vmatprep.subr.mxu0 0.0
    %239 = vmatpush1.msra.mxu0 0.0
    %240 = vmatprep.subr.mxu0 0.0
    %241 = vmatpush1.msra.mxu0 0.0
    %242 = vmatprep.subr.mxu0 0.0
    %243 = vmatpush1.msra.mxu0 0.0
    %244 = vmatprep.subr.mxu0 0.0
    %245 = vmatpush1.msra.mxu0 0.0
    %246 = vmatprep.subr.mxu0 0.0
    %247 = vmatpush1.msra.mxu0 0.0
    %248 = vmatprep.subr.mxu0 0.0
    %249 = vmatpush1.msra.mxu0 0.0
    %250 = vmatprep.subr.mxu0 0.0
    %251 = vmatpush1.msra.mxu0 0.0
    %252 = vmatprep.subr.mxu0 0.0
    %253 = vmatpush1.msra.mxu0 0.0
    %254 = vmatprep.subr.mxu0 0.0
    %255 = vmatpush1.msra.mxu0 0.0
    %256 = vmatprep.subr.mxu0 0.0
    %257 = vmatpush1.msra.mxu0 0.0
    %258 = vmatprep.subr.mxu0 0.0
    %259 = vmatpush1.msra.mxu0 0.0
    %260 = vmatprep.mubr.f32.mxu0 0.0
    %261 = vmatmul.mubr.f32.gmra.mrb[0].mxu0 %v191
    %v262 = vpop.f32.mrb[0].mxu0
    %v263 = vadd.f32 %v188, %v262
    %v264 = vpop.f32.mrb[0].mxu0
    %265 = vmatprep.mubr.f32.mxu0 0.0
    %266 = vmatmul.mubr.f32.gmra.mrb[0].mxu0 %v194
    %v267 = vpop.f32.mrb[0].mxu0
    %v268 = vadd.f32 %v188, %v267
    %v269 = vpop.f32.mrb[0].mxu0
    %270 = vdwg.mxu0
    %v271 = vtanh.pop %v263
    %v272 = vtanh.pop %v268
    %v273 = vld [vmem:[#allocation8] sm:$0xff]
    %v274 = vld [vmem:[#allocation8 + $0x8] sm:$0xff]
    %v275 = vld [vmem:[#allocation8 + $0x10] sm:$0xff]
    %v276 = vld [vmem:[#allocation8 + $0x18] sm:$0xff]
    %v277 = vld [vmem:[%s6] sm:$0x1]
    %v279 = vlaneseq
    %v280 = vshrl.u32 %v279, 7
    %v281 = vsub.s32 0, %v280
    %v282 = vrot.slane %v277, %v281
    %v285 = vsel %vm95, %v271, 0
    %v288 = vsel %vm95, %v272, 0
    %290 = vmatprep.subr.mxu0 0.0
    %291 = vmatpush1.msra.mxu0 %v273
    %292 = vmatprep.subr.mxu0 0.0
    %293 = vmatpush1.msra.mxu0 %v274
    %294 = vmatprep.subr.mxu0 0.0
    %295 = vmatpush1.msra.mxu0 %v275
    %296 = vmatprep.subr.mxu0 0.0
    %297 = vmatpush1.msra.mxu0 %v276
    %298 = vmatprep.subr.mxu0 0.0
    %299 = vmatpush1.msra.mxu0 0.0
    %300 = vmatprep.subr.mxu0 0.0
    %301 = vmatpush1.msra.mxu0 0.0
    %302 = vmatprep.subr.mxu0 0.0
    %303 = vmatpush1.msra.mxu0 0.0
    %304 = vmatprep.subr.mxu0 0.0
    %305 = vmatpush1.msra.mxu0 0.0
    %306 = vmatprep.subr.mxu0 0.0
    %307 = vmatpush1.msra.mxu0 0.0
    %308 = vmatprep.subr.mxu0 0.0
    %309 = vmatpush1.msra.mxu0 0.0
    %310 = vmatprep.subr.mxu0 0.0
    %311 = vmatpush1.msra.mxu0 0.0
    %312 = vmatprep.subr.mxu0 0.0
    %313 = vmatpush1.msra.mxu0 0.0
    %314 = vmatprep.subr.mxu0 0.0
    %315 = vmatpush1.msra.mxu0 0.0
    %316 = vmatprep.subr.mxu0 0.0
    %317 = vmatpush1.msra.mxu0 0.0
    %318 = vmatprep.subr.mxu0 0.0
    %319 = vmatpush1.msra.mxu0 0.0
    %320 = vmatprep.subr.mxu0 0.0
    %321 = vmatpush1.msra.mxu0 0.0
    %322 = vmatprep.subr.mxu0 0.0
    %323 = vmatpush1.msra.mxu0 0.0
    %324 = vmatprep.subr.mxu0 0.0
    %325 = vmatpush1.msra.mxu0 0.0
    %326 = vmatprep.subr.mxu0 0.0
    %327 = vmatpush1.msra.mxu0 0.0
    %328 = vmatprep.subr.mxu0 0.0
    %329 = vmatpush1.msra.mxu0 0.0
    %330 = vmatprep.subr.mxu0 0.0
    %331 = vmatpush1.msra.mxu0 0.0
    %332 = vmatprep.subr.mxu0 0.0
    %333 = vmatpush1.msra.mxu0 0.0
    %334 = vmatprep.subr.mxu0 0.0
    %335 = vmatpush1.msra.mxu0 0.0
    %336 = vmatprep.subr.mxu0 0.0
    %337 = vmatpush1.msra.mxu0 0.0
    %338 = vmatprep.subr.mxu0 0.0
    %339 = vmatpush1.msra.mxu0 0.0
    %340 = vmatprep.subr.mxu0 0.0
    %341 = vmatpush1.msra.mxu0 0.0
    %342 = vmatprep.subr.mxu0 0.0
    %343 = vmatpush1.msra.mxu0 0.0
    %344 = vmatprep.subr.mxu0 0.0
    %345 = vmatpush1.msra.mxu0 0.0
    %346 = vmatprep.subr.mxu0 0.0
    %347 = vmatpush1.msra.mxu0 0.0
    %348 = vmatprep.subr.mxu0 0.0
    %349 = vmatpush1.msra.mxu0 0.0
    %350 = vmatprep.subr.mxu0 0.0
    %351 = vmatpush1.msra.mxu0 0.0
    %352 = vmatprep.subr.mxu0 0.0
    %353 = vmatpush1.msra.mxu0 0.0
    %354 = vmatprep.mubr.f32.mxu0 0.0
    %355 = vmatmul.mubr.f32.gmra.mrb[0].mxu0 %v285
    %v356 = vpop.f32.mrb[0].mxu0
    %v357 = vadd.f32 %v282, %v356
    %v358 = vpop.f32.mrb[0].mxu0
    %359 = vmatprep.mubr.f32.mxu0 0.0
    %360 = vmatmul.mubr.f32.gmra.mrb[0].mxu0 %v288
    %v361 = vpop.f32.mrb[0].mxu0
    %v362 = vadd.f32 %v282, %v361
    %v363 = vpop.f32.mrb[0].mxu0
    %364 = vdwg.mxu0
    %365 = vst [vmem:[#allocation10] sm:$0xff] %v357
    %366 = vst [vmem:[#allocation10 + $0x8] sm:$0xff] %v362
    // Predicated region
    $region46: #{tpu_custom_call.1} parent=1 // pred_check
      _
    $region47: #{tpu_custom_call.1} parent=1 // pred_check_branch
      %368 = sbr.rel (0) target = $region49
    $region48: #{tpu_custom_call.1} parent=1 // pred_region
      %s370 = ssub.s32 256, 256
      %371 = vsyncadd [#allocation4], %s370
      %s372 = sshll.u32 [#allocation10], 4
      %s373 = int_to_ptr.vmem [resolvable:$true] %s372
      %378 = dma.vmem_to_hbm [thread:$0]  %s373, 256, %s7, [#allocation4], 128, 128, 8
    $region49: #{tpu_custom_call.1} parent=1 // pred_fallthru
      _
    // Predicated region
    $region50: #{tpu_custom_call.1} parent=1 // pred_check
      _
    $region51: #{tpu_custom_call.1} parent=1 // pred_check_branch
      %380 = sbr.rel (0) target = $region53
    $region52: #{tpu_custom_call.1} parent=1 // pred_region
      %381 = dma.done [#allocation4], 256
    $region53: #{tpu_custom_call.1} parent=1 // pred_fallthru
      _
    %382 = vsyncpa [#allocation3], 1
    %383 = vsyncpa [#allocation6], 1
    %384 = vsyncpa [#allocation9], 1
    %385 = vsyncpa [#allocation4], 1

</llo_original>
